<compile_context>
chip_gen: v7x
topology: tpu7x:2x2x1
jax: 0.10.0
libtpu: 0.0.40
codegen_flags: <defaults>
</compile_context>

<pallas_src>
import jax
import jax.numpy as jnp
from jax.experimental import pallas as pl
from jax.experimental.pallas import tpu as pltpu


# --------------------------------------------------------------------------- #
# Hardware introspection (generation-aware tiling / VMEM limits)
# --------------------------------------------------------------------------- #
def _tpu_generation():
    try:
        kind = jax.devices()[0].device_kind.lower()
    except Exception:
        return "v6e"
    if "v5 lite" in kind or "v5e" in kind or "v5lite" in kind:
        return "v5e"
    if "v7" in kind:
        return "v7x"
    if "v6" in kind:
        return "v6e"
    return "v6e"


def _vmem_budget(gen):
    """(scoped_default_bytes, physical_bytes) for the current chip."""
    phys_fallback = {"v5e": 128 << 20, "v6e": 128 << 20, "v7x": 64 << 20}
    try:
        phys = int(pltpu.get_tpu_info().vmem_capacity_bytes)
    except Exception:
        phys = phys_fallback.get(gen, 128 << 20)
    scoped_default = (16 << 20) if gen == "v5e" else (32 << 20)
    return scoped_default, phys


# Roofline-derived default tiles (tm, tn, tk) per (generation, narrow-operand).
# All multiples of 256 (native for the 2x256x256 MXU on v6e/v7x); each keeps
# the double-buffered working set inside the generation's scoped-VMEM budget.
_TILE_DEFAULTS = {
    ("v5e", True): (512, 512, 512),     # AI ~256 FLOP/B vs ~240 balance point
    ("v5e", False): (1024, 1024, 512),
    ("v6e", True): (1024, 2048, 512),   # AI ~683 FLOP/B vs ~680 balance point
    ("v6e", False): (1024, 1024, 512),
    ("v7x", True): (512, 1024, 512),    # AI ~341 FLOP/B vs ~310 balance point
    ("v7x", False): (512, 1024, 512),
}


# --------------------------------------------------------------------------- #
# Kernels
# --------------------------------------------------------------------------- #
def _qkv_kernel_single_k(x_ref, w_ref, b_ref, o_ref):
    """Whole K in one block: no reduction axis, no accumulator, no branches."""
    o_ref[...] = (
        jnp.dot(x_ref[...], w_ref[...], preferred_element_type=jnp.float32)
        + b_ref[...].astype(jnp.float32)
    ).astype(o_ref.dtype)


def _qkv_kernel_f32_out(x_ref, w_ref, b_ref, o_ref):
    """f32 output: accumulate directly into the k-invariant output block
    (it stays VMEM-resident across the K grid axis), bias folded at k==0."""
    k = pl.program_id(2)

    @pl.when(k == 0)
    def _init():
        o_ref[...] = jnp.broadcast_to(b_ref[...].astype(jnp.float32), o_ref.shape)

    o_ref[...] += jnp.dot(
        x_ref[...], w_ref[...], preferred_element_type=jnp.float32
    )


def _qkv_kernel_acc(x_ref, w_ref, b_ref, o_ref, acc_ref):
    """Narrow output dtype: f32 VMEM accumulator, cast/store at the last K."""
    k = pl.program_id(2)

    @pl.when(k == 0)
    def _init():
        acc_ref[...] = jnp.broadcast_to(
            b_ref[...].astype(jnp.float32), acc_ref.shape
        )

    acc_ref[...] += jnp.dot(
        x_ref[...], w_ref[...], preferred_element_type=jnp.float32
    )

    @pl.when(k == pl.num_programs(2) - 1)
    def _store():
        o_ref[...] = acc_ref[...].astype(o_ref.dtype)


# --------------------------------------------------------------------------- #
# Wrapper
# --------------------------------------------------------------------------- #
def _round_up(x, m):
    return (x + m - 1) // m * m


def _pick_tile(dim, preferred, granule):
    """Tile size + padded extent honoring the (sublane, 128) block constraint.

    Full-extent blocks are always legal; otherwise the tile is a multiple of
    `granule` and the dimension is padded up to a tile multiple.
    """
    if dim <= preferred:
        return dim, dim
    tile = max(granule, (preferred // granule) * granule)
    return tile, _round_up(dim, tile)


def fused_qkv_matmul(x2d, w_pad, b_pad, *, tn, tk, tm_pref=None,
                     out_dtype=None, gen=None):
    """(M, H) @ (Kp, Np) weight + bias -> (M, Np) as a tiled Pallas TPU matmul.

    `w_pad` is the pre-transposed, pre-padded weight (Kp, Np) with Kp a
    multiple of `tk` (or Kp == tk) and Np a multiple of `tn` (or Np == tn);
    `b_pad` is (1, Np).  Padding the weight here per call would cost an extra
    HBM read+write of the whole weight, so the caller does it once at init.
    """
    gen = gen or _tpu_generation()
    M, H = x2d.shape
    Kp, Np = w_pad.shape
    assert Kp >= H and b_pad.shape == (1, Np)
    assert Np % tn == 0 and Kp % tk == 0
    out_dtype = jnp.dtype(out_dtype or x2d.dtype)

    in_item = jnp.dtype(x2d.dtype).itemsize
    out_item = out_dtype.itemsize
    sub = 8 if in_item >= 4 else 32 // in_item  # sublane granule

    if tm_pref is None:
        tm_pref = _TILE_DEFAULTS[(gen, in_item < 4)][0]
    tm_, Mp = _pick_tile(M, tm_pref, sub)
    tn_, tk_ = tn, tk

    # Per-call padding is limited to the activations (rows to the M tile,
    # columns to the pre-padded weight K); zero K-padding adds nothing to
    # the accumulation.
    if Mp != M or Kp != H:
        x2d = jnp.pad(x2d, ((0, Mp - M), (0, Kp - H)))

    grid_i, grid_j, grid_k = Mp // tm_, Np // tn_, Kp // tk_

    # v7x has two TensorCores: make sure both get work across the "parallel"
    # i/j axes when the whole output would otherwise be a single tile.
    if gen == "v7x":
        while (grid_i * grid_j < 2 and tn_ % 256 == 0 and tn_ >= 512
               and Np % (tn_ // 2) == 0):
            tn_ //= 2
            grid_j = Np // tn_

    single_k = grid_k == 1
    f32_out = out_dtype == jnp.dtype(jnp.float32)
    use_acc = (not single_k) and (not f32_out)

    if single_k:
        grid = (grid_i, grid_j)
        kernel = _qkv_kernel_single_k
        in_specs = [
            pl.BlockSpec((tm_, tk_), lambda i, j: (i, 0)),
            pl.BlockSpec((tk_, tn_), lambda i, j: (0, j)),
            pl.BlockSpec((1, tn_), lambda i, j: (0, j)),
        ]
        out_specs = pl.BlockSpec((tm_, tn_), lambda i, j: (i, j))
        scratch = []
        dims = ("parallel", "parallel")
    else:
        grid = (grid_i, grid_j, grid_k)
        kernel = _qkv_kernel_f32_out if f32_out else _qkv_kernel_acc
        in_specs = [
            pl.BlockSpec((tm_, tk_), lambda i, j, k: (i, k)),
            pl.BlockSpec((tk_, tn_), lambda i, j, k: (k, j)),
            pl.BlockSpec((1, tn_), lambda i, j, k: (0, j)),
        ]
        out_specs = pl.BlockSpec((tm_, tn_), lambda i, j, k: (i, j))
        scratch = [pltpu.VMEM((tm_, tn_), jnp.float32)] if use_acc else []
        dims = ("parallel", "parallel", "arbitrary")

    # Double-buffered input tiles + double-buffered output tile (+ f32 acc).
    vmem_est = (2 * (tm_ * tk_ + tk_ * tn_ + tn_) * in_item
                + 2 * tm_ * tn_ * out_item
                + (tm_ * tn_ * 4 if use_acc else 0))
    scoped_default, phys = _vmem_budget(gen)
    cp_kwargs = dict(dimension_semantics=dims)
    if vmem_est > (scoped_default * 9) // 10:
        # Raise the scoped limit only when the chosen tiles need it, and never
        # promise more than ~75% of this generation's physical VMEM
        # (64 MiB on v7x, 128 MiB on v5e/v6e).
        cp_kwargs["vmem_limit_bytes"] = int(
            min(max(vmem_est * 5 // 4, scoped_default), phys * 3 // 4)
        )

    cost = pl.CostEstimate(
        flops=2 * M * H * Np,
        transcendentals=0,
        bytes_accessed=(M * H + Kp * Np + Np) * in_item + M * Np * out_item,
    )

    out_p = pl.pallas_call(
        kernel,
        out_shape=jax.ShapeDtypeStruct((Mp, Np), out_dtype),
        grid_spec=pltpu.PrefetchScalarGridSpec(
            num_scalar_prefetch=0,
            grid=grid,
            in_specs=in_specs,
            out_specs=out_specs,
            scratch_shapes=scratch,
        ),
        compiler_params=pltpu.CompilerParams(**cp_kwargs),
        cost_estimate=cost,
    )(x2d, w_pad, b_pad)

    return out_p[:M] if Mp != M else out_p   # N padding (if any) sliced by caller


# --------------------------------------------------------------------------- #
# Module
# --------------------------------------------------------------------------- #
class FusedQKVPallas:
    """JAX/Pallas port of slapo's FusedQKV.

    Parameters are held with the weight pre-transposed AND pre-padded to
    (Kp, Np), out-features reordered into contiguous [Q | K | V] slabs
    (HQ = local_heads * head_size), so the q/k/v split is three free,
    lane-dense column slices of the matmul output and the per-forward path
    never re-pads the weight.  Random init is distribution-identical to the
    original; `load_torch_params` / `interleaved_params` convert to/from
    slapo's interleaved (head, head_dim, 3) out-feature ordering so real
    PyTorch checkpoints map correctly.
    """

    def __init__(self, hidden_size, num_heads, world_size, key,
                 dtype=jnp.float32, tm=None, tn=None, tk=None):
        assert num_heads % world_size == 0
        assert hidden_size % num_heads == 0
        self.hidden_size = hidden_size
        self.num_heads = num_heads
        self.head_size = hidden_size // num_heads
        self.world_size = world_size
        self.local_heads = num_heads // world_size
        self.dtype = jnp.dtype(dtype)
        self.gen = _tpu_generation()

        narrow = self.dtype.itemsize < 4
        d_tm, d_tn, d_tk = _TILE_DEFAULTS[(self.gen, narrow)]
        self.tm_pref = tm if tm is not None else d_tm
        tn_pref = tn if tn is not None else d_tn
        tk_pref = tk if tk is not None else d_tk

        # Per-shard out_features (mirrors slapo's tensor-parallel sharding of
        # the fused linear; equals num_heads*head_size*3 when world_size == 1).
        self.out_features = self.local_heads * self.head_size * 3

        # N/K tiles are fixed per module so the weight is padded exactly once.
        self.tn, self.Np = _pick_tile(self.out_features, tn_pref, 128)
        self.tk, self.Kp = _pick_tile(hidden_size, tk_pref, 128)

        k_w, k_b = jax.random.split(key)
        bound = 1.0 / (hidden_size ** 0.5)   # nn.Linear default uniform bound
        w = jax.random.uniform(
            k_w, (self.out_features, hidden_size), dtype=jnp.float32,
            minval=-bound, maxval=bound,
        )
        b = jax.random.uniform(
            k_b, (self.out_features,), dtype=jnp.float32,
            minval=-bound, maxval=bound,
        )
        # TODO(synk): optional int8 (v5e/v6e) / fp8 (v7x) weight path for
        # decode-shaped, weight-bandwidth-bound calls.
        self._set_slab_params(w.T.astype(self.dtype), b.astype(self.dtype))

    # -- parameter storage (slab layout, padded once) ------------------------ #
    def _set_slab_params(self, w_t, bias):
        """w_t: (hidden, out_features) with [Q|K|V] column slabs; bias: (out_features,)."""
        H, OUT = self.hidden_size, self.out_features
        if (self.Kp, self.Np) != (H, OUT):
            w_t = jnp.pad(w_t, ((0, self.Kp - H), (0, self.Np - OUT)))
            bias = jnp.pad(bias, (0, self.Np - OUT))
        self.weight_t = w_t                  # (Kp, Np)
        self.bias2d = bias.reshape(1, self.Np)

    # -- layout conversion (slab <-> slapo interleaved) ---------------------- #
    def _interleave_perm(self):
        """perm[c_interleaved] = c_slab, with interleaved index
        c = h*(head_size*3) + d*3 + t and slab index c = t*HQ + h*head_size + d."""
        HQ = self.local_heads * self.head_size
        h = jnp.arange(self.local_heads)[:, None, None]
        d = jnp.arange(self.head_size)[None, :, None]
        t = jnp.arange(3)[None, None, :]
        return (t * HQ + h * self.head_size + d).reshape(-1)

    def interleaved_params(self):
        """Return (weight, bias) in the original nn.Linear / slapo layout:
        weight (out_features, hidden), out-features interleaved as (h, d, 3)."""
        perm = self._interleave_perm()
        H, OUT = self.hidden_size, self.out_features
        w = self.weight_t[:H, :OUT].T      # (OUT, H), slab order
        b = self.bias2d[0, :OUT]
        return w[perm], b[perm]

    def load_torch_params(self, weight_interleaved, bias_interleaved):
        """Load PyTorch FusedQKV params (interleaved layout) into slab layout."""
        perm = self._interleave_perm()
        inv = jnp.argsort(perm)  # slab idx -> interleaved idx
        w_slab = jnp.asarray(weight_interleaved, self.dtype)[inv]   # (OUT, H)
        b_slab = jnp.asarray(bias_interleaved, self.dtype)[inv]
        self._set_slab_params(w_slab.T, b_slab)

    # -- forward -------------------------------------------------------------- #
    def __call__(self, hidden_states):
        # hidden_states: (B, S, hidden)
        B, S, H = hidden_states.shape
        assert H == self.hidden_size
        x2d = hidden_states.reshape(B * S, H).astype(self.dtype)
        out = fused_qkv_matmul(
            x2d, self.weight_t, self.bias2d,
            tm_pref=self.tm_pref, tn=self.tn, tk=self.tk,
            out_dtype=self.dtype, gen=self.gen,
        )                                                    # (B*S, Np)
        HQ = self.local_heads * self.head_size

        def to4d(a):
            return a.reshape(B, S, self.local_heads, self.head_size)

        # Contiguous, lane-dense slices — the q/k/v split is free; any N
        # padding lives past 3*HQ and is never read.
        q = to4d(out[:, 0 * HQ:1 * HQ])
        k = to4d(out[:, 1 * HQ:2 * HQ])
        v = to4d(out[:, 2 * HQ:3 * HQ])
        return [q, k, v]


# --------------------------------------------------------------------------- #
# Self-test
# --------------------------------------------------------------------------- #
if __name__ == "__main__":
    # --- 1) small fp32 config (matches the original module defaults);
    #        exercises the single-K-block 2D-grid kernel -------------------- #
    hidden_size, num_heads, world_size = 32, 4, 1
    batch, seq = 2, 8

    key = jax.random.PRNGKey(0)
    k_param, k_x = jax.random.split(key)

    module = FusedQKVPallas(hidden_size, num_heads, world_size, k_param,
                            dtype=jnp.float32)
    x = jax.random.normal(k_x, (batch, seq, hidden_size), dtype=jnp.float32)

    q, k, v = module(x)
    jax.block_until_ready([q, k, v])

    # Reference: the ORIGINAL FusedQKV math (interleaved weight layout,
    # reshape to (..., heads, head_size, 3), split on the size-3 axis).
    w_int, b_int = module.interleaved_params()
    ref = x.reshape(-1, hidden_size) @ w_int.T + b_int
    ref = ref.reshape(batch, seq, num_heads // world_size,
                      hidden_size // num_heads, 3)
    assert q.shape == (batch, seq, num_heads // world_size,
                       hidden_size // num_heads)
    assert jnp.allclose(q, ref[..., 0], atol=1e-5)
    assert jnp.allclose(k, ref[..., 1], atol=1e-5)
    assert jnp.allclose(v, ref[..., 2], atol=1e-5)

    # --- 2) f32 with forced small tiles: multi-tile (i, j, k) grid, K
    #        accumulation directly into the f32 output block with the
    #        bias-folded init, and M-tail padding (M = 18) ------------------ #
    hs2, nh2, b2, s2 = 256, 8, 2, 9
    mod2 = FusedQKVPallas(hs2, nh2, 1, jax.random.PRNGKey(1),
                          dtype=jnp.float32, tm=8, tn=128, tk=128)
    x2 = jax.random.normal(jax.random.PRNGKey(2), (b2, s2, hs2),
                           dtype=jnp.float32)
    q2, k2, v2 = mod2(x2)
    jax.block_until_ready([q2, k2, v2])
    w2_int, b2_int = mod2.interleaved_params()
    ref2 = (x2.reshape(-1, hs2) @ w2_int.T + b2_int).reshape(
        b2, s2, nh2, hs2 // nh2, 3)
    assert jnp.allclose(q2, ref2[..., 0], atol=1e-4)
    assert jnp.allclose(k2, ref2[..., 1], atol=1e-4)
    assert jnp.allclose(v2, ref2[..., 2], atol=1e-4)

    # --- 3) bf16 operands with a multi-K grid: exercises the f32 VMEM
    #        accumulator + cast-at-last-K path ------------------------------ #
    hs3, nh3, b3, s3 = 256, 8, 2, 9
    mod3 = FusedQKVPallas(hs3, nh3, 1, jax.random.PRNGKey(3),
                          dtype=jnp.bfloat16, tm=16, tn=128, tk=128)
    x3 = jax.random.normal(jax.random.PRNGKey(4), (b3, s3, hs3),
                           dtype=jnp.float32).astype(jnp.bfloat16)
    q3, k3, v3 = mod3(x3)
    jax.block_until_ready([q3, k3, v3])
    w3_int, b3_int = mod3.interleaved_params()
    ref3 = (x3.astype(jnp.float32).reshape(-1, hs3)
            @ w3_int.T.astype(jnp.float32)
            + b3_int.astype(jnp.float32)).reshape(b3, s3, nh3, hs3 // nh3, 3)
    assert jnp.allclose(q3.astype(jnp.float32), ref3[..., 0],
                        atol=5e-2, rtol=5e-2)
    assert jnp.allclose(v3.astype(jnp.float32), ref3[..., 2],
                        atol=5e-2, rtol=5e-2)

    print("KERNEL_OK")
</pallas_src>

<mosaic_0001>
module attributes {stable_mosaic.version = 11 : i64} {
  func.func @_qkv_kernel_single_k(%arg0: i32, %arg1: i32, %arg2: memref<16x32xf32, #tpu.memory_space<vmem>>, %arg3: memref<32x96xf32, #tpu.memory_space<vmem>>, %arg4: memref<1x96xf32, #tpu.memory_space<vmem>>, %arg5: memref<16x96xf32, #tpu.memory_space<vmem>>) attributes {dimension_semantics = [#tpu.dimension_semantics<parallel>, #tpu.dimension_semantics<parallel>], iteration_bounds = array<i64: 1, 1>, scalar_prefetch = 0 : i64, scratch_operands = 0 : i64, tpu.core_type = #tpu.core_type<tc>, window_params = [{transform_indices = @transform_0, window_bounds = array<i64: 16, 32>}, {transform_indices = @transform_1, window_bounds = array<i64: 32, 96>}, {transform_indices = @transform_2, window_bounds = array<i64: 1, 96>}, {transform_indices = @transform_3, window_bounds = array<i64: 16, 96>}]} {
    %c0 = arith.constant 0 : index
    %c0_0 = arith.constant 0 : index
    %0 = vector.load %arg2[%c0, %c0_0] : memref<16x32xf32, #tpu.memory_space<vmem>>, vector<16x32xf32>
    %c0_1 = arith.constant 0 : index
    %c0_2 = arith.constant 0 : index
    %1 = vector.load %arg3[%c0_1, %c0_2] : memref<32x96xf32, #tpu.memory_space<vmem>>, vector<32x96xf32>
    %cst = arith.constant dense<0.000000e+00> : vector<16x96xf32>
    %2 = tpu.matmul %0, %1, %cst {dimension_numbers = #tpu.dot_dimension_numbers<[1], [0], [0], [1], [0, 0, 1, 1], [], []>} : vector<16x32xf32>, vector<32x96xf32>, vector<16x96xf32> -> vector<16x96xf32>
    %c0_3 = arith.constant 0 : index
    %c0_4 = arith.constant 0 : index
    %3 = vector.load %arg4[%c0_3, %c0_4] : memref<1x96xf32, #tpu.memory_space<vmem>>, vector<1x96xf32>
    %4 = vector.broadcast %3 : vector<1x96xf32> to vector<16x96xf32>
    %5 = arith.addf %2, %4 : vector<16x96xf32>
    %c0_5 = arith.constant 0 : index
    %c0_6 = arith.constant 0 : index
    %6 = vector.load %arg5[%c0_5, %c0_6] : memref<16x96xf32, #tpu.memory_space<vmem>>, vector<16x96xf32>
    tpu.vector_store %arg5[%c0_5, %c0_6], %5 {strides = array<i32>} : memref<16x96xf32, #tpu.memory_space<vmem>>, vector<16x96xf32>,
    return
  }
  func.func @transform_0(%arg0: i32, %arg1: i32) -> (i32, i32) {
    %c0_i32 = arith.constant 0 : i32
    %c0_i32_0 = arith.constant 0 : i32
    return %arg0, %c0_i32 : i32, i32
  }
  func.func @transform_1(%arg0: i32, %arg1: i32) -> (i32, i32) {
    %c0_i32 = arith.constant 0 : i32
    %c0_i32_0 = arith.constant 0 : i32
    return %c0_i32, %arg1 : i32, i32
  }
  func.func @transform_2(%arg0: i32, %arg1: i32) -> (i32, i32) {
    %c0_i32 = arith.constant 0 : i32
    %c0_i32_0 = arith.constant 0 : i32
    return %c0_i32, %arg1 : i32, i32
  }
  func.func @transform_3(%arg0: i32, %arg1: i32) -> (i32, i32) {
    %c0_i32 = arith.constant 0 : i32
    return %arg0, %arg1 : i32, i32
  }
}

</mosaic_0001>

<llo_original>
// kernel: tpu_custom_call.1
$region0: #{tpu_custom_call.1}
  #allocation0 [shape = 'u32[]', space=smem, size = 0x4, offset = 0x4, fixed_abs, tag = 'smem constant byte address 0x4 - core index']
  #allocation1 [shape = 'u32[144,128]{1,0:T(1,128)}', space=vmem, size = 0x12000, scoped, tag = 'internal scratch']
  %s0 = inlined_call_operand.hbm [shape: f32[16,32], index: 0, kind: input, shape index: {}]
  %s1 = inlined_call_operand.hbm [shape: f32[32,96], index: 1, kind: input, shape index: {}]
  %s2 = inlined_call_operand.vmem [shape: f32[1,96], index: 2, kind: input, shape index: {}]
  %s3 = inlined_call_operand.hbm [shape: f32[16,96], index: 3, kind: output, shape index: {}]
  %s4 = sld [smem:[#allocation0]]
  $region30: #{tpu_custom_call.1} parent=0
    _
  %s6 = ssub.s32 1, %s4
  %s7 = scalar_select 0, %s6, %s4
  $region1: #{tpu_custom_call.1} parent=0
    #allocation2 [shape = 'u8[8192]{0}', space=vmem, size = 0x2000, scoped, tag = 'input window, operand 0, single buffered']
    #allocation3 [shape = 's32[1]{0}', space=sflag, size = 0x4, scoped, tag = 'scoped memory for tpu_custom_call.1']
    #allocation4 [shape = 's32[1]{0}', space=sflag, size = 0x4, scoped, tag = 'scoped memory for tpu_custom_call.1']
    #allocation5 [shape = 'u8[16384]{0}', space=vmem, size = 0x4000, scoped, tag = 'input window, operand 1, single buffered']
    #allocation6 [shape = 's32[1]{0}', space=sflag, size = 0x4, scoped, tag = 'scoped memory for tpu_custom_call.1']
    #allocation7 [shape = 'u8[8192]{0}', space=vmem, size = 0x2000, scoped, tag = 'output window, operand 0, single buffered']
    %8 = vsyncpa [#allocation3], 0
    %9 = vsyncpa [#allocation6], 0
    %10 = vsyncpa [#allocation4], 0
    // Predicated region
    $region2: #{tpu_custom_call.1} parent=1 // pred_check
      _
    $region3: #{tpu_custom_call.1} parent=1 // pred_check_branch
      %12 = sbr.rel (0) target = $region5
    $region4: #{tpu_custom_call.1} parent=1 // pred_region
      %s14 = ssub.s32 256, 256
      %15 = vsyncadd [#allocation3], %s14
      %s16 = sshll.u32 [#allocation2], 4
      %s17 = int_to_ptr.vmem [resolvable:$true] %s16
      %22 = dma.hbm_to_vmem [thread:$0]  %s0, 256, %s17, [#allocation3], 128, 128, 8
    $region5: #{tpu_custom_call.1} parent=1 // pred_fallthru
      _
    // Predicated region
    $region6: #{tpu_custom_call.1} parent=1 // pred_check
      _
    $region7: #{tpu_custom_call.1} parent=1 // pred_check_branch
      %24 = sbr.rel (0) target = $region9
    $region8: #{tpu_custom_call.1} parent=1 // pred_region
      %s26 = ssub.s32 512, 512
      %27 = vsyncadd [#allocation6], %s26
      %s28 = sshll.u32 [#allocation5], 4
      %s29 = int_to_ptr.vmem [resolvable:$true] %s28
      %34 = dma.hbm_to_vmem [thread:$0]  %s1, 512, %s29, [#allocation6], 128, 128, 8
    $region9: #{tpu_custom_call.1} parent=1 // pred_fallthru
      _
    // Predicated region
    $region10: #{tpu_custom_call.1} parent=1 // pred_check
      _
    $region11: #{tpu_custom_call.1} parent=1 // pred_check_branch
      %36 = sbr.rel (0) target = $region13
    $region12: #{tpu_custom_call.1} parent=1 // pred_region
      _
    $region13: #{tpu_custom_call.1} parent=1 // pred_fallthru
      _
    // Predicated region
    $region14: #{tpu_custom_call.1} parent=1 // pred_check
      _
    $region15: #{tpu_custom_call.1} parent=1 // pred_check_branch
      %38 = sbr.rel (0) target = $region17
    $region16: #{tpu_custom_call.1} parent=1 // pred_region
      %39 = dma.done [#allocation3], 256
    $region17: #{tpu_custom_call.1} parent=1 // pred_fallthru
      _
    // Predicated region
    $region18: #{tpu_custom_call.1} parent=1 // pred_check
      _
    $region19: #{tpu_custom_call.1} parent=1 // pred_check_branch
      %41 = sbr.rel (0) target = $region21
    $region20: #{tpu_custom_call.1} parent=1 // pred_region
      %42 = dma.done [#allocation6], 512
    $region21: #{tpu_custom_call.1} parent=1 // pred_fallthru
      _
    %v43 = vld [vmem:[#allocation2] sm:$0xff]
    %v44 = vld [vmem:[#allocation2 + $0x8] sm:$0xff]
    %v45 = vld [vmem:[#allocation5] sm:$0xff]
    %v46 = vld [vmem:[#allocation5 + $0x8] sm:$0xff]
    %v47 = vld [vmem:[#allocation5 + $0x10] sm:$0xff]
    %v48 = vld [vmem:[#allocation5 + $0x18] sm:$0xff]
    %v49 = vld [vmem:[%s2] sm:$0x1]
    %v51 = vlaneseq
    %v52 = vshrl.u32 %v51, 7
    %v53 = vsub.s32 0, %v52
    %v54 = vrot.slane %v49, %v53
    %vm56 = vcmask 261120
    %v58 = vsel %vm56, %v43, 0
    %v61 = vsel %vm56, %v44, 0
    %63 = vmatprep.subr.mxu0 0.0
    %64 = vmatpush1.msra.mxu0 %v45
    %65 = vmatprep.subr.mxu0 0.0
    %66 = vmatpush1.msra.mxu0 %v46
    %67 = vmatprep.subr.mxu0 0.0
    %68 = vmatpush1.msra.mxu0 %v47
    %69 = vmatprep.subr.mxu0 0.0
    %70 = vmatpush1.msra.mxu0 %v48
    %71 = vmatprep.subr.mxu0 0.0
    %72 = vmatpush1.msra.mxu0 0.0
    %73 = vmatprep.subr.mxu0 0.0
    %74 = vmatpush1.msra.mxu0 0.0
    %75 = vmatprep.subr.mxu0 0.0
    %76 = vmatpush1.msra.mxu0 0.0
    %77 = vmatprep.subr.mxu0 0.0
    %78 = vmatpush1.msra.mxu0 0.0
    %79 = vmatprep.subr.mxu0 0.0
    %80 = vmatpush1.msra.mxu0 0.0
    %81 = vmatprep.subr.mxu0 0.0
    %82 = vmatpush1.msra.mxu0 0.0
    %83 = vmatprep.subr.mxu0 0.0
    %84 = vmatpush1.msra.mxu0 0.0
    %85 = vmatprep.subr.mxu0 0.0
    %86 = vmatpush1.msra.mxu0 0.0
    %87 = vmatprep.subr.mxu0 0.0
    %88 = vmatpush1.msra.mxu0 0.0
    %89 = vmatprep.subr.mxu0 0.0
    %90 = vmatpush1.msra.mxu0 0.0
    %91 = vmatprep.subr.mxu0 0.0
    %92 = vmatpush1.msra.mxu0 0.0
    %93 = vmatprep.subr.mxu0 0.0
    %94 = vmatpush1.msra.mxu0 0.0
    %95 = vmatprep.subr.mxu0 0.0
    %96 = vmatpush1.msra.mxu0 0.0
    %97 = vmatprep.subr.mxu0 0.0
    %98 = vmatpush1.msra.mxu0 0.0
    %99 = vmatprep.subr.mxu0 0.0
    %100 = vmatpush1.msra.mxu0 0.0
    %101 = vmatprep.subr.mxu0 0.0
    %102 = vmatpush1.msra.mxu0 0.0
    %103 = vmatprep.subr.mxu0 0.0
    %104 = vmatpush1.msra.mxu0 0.0
    %105 = vmatprep.subr.mxu0 0.0
    %106 = vmatpush1.msra.mxu0 0.0
    %107 = vmatprep.subr.mxu0 0.0
    %108 = vmatpush1.msra.mxu0 0.0
    %109 = vmatprep.subr.mxu0 0.0
    %110 = vmatpush1.msra.mxu0 0.0
    %111 = vmatprep.subr.mxu0 0.0
    %112 = vmatpush1.msra.mxu0 0.0
    %113 = vmatprep.subr.mxu0 0.0
    %114 = vmatpush1.msra.mxu0 0.0
    %115 = vmatprep.subr.mxu0 0.0
    %116 = vmatpush1.msra.mxu0 0.0
    %117 = vmatprep.subr.mxu0 0.0
    %118 = vmatpush1.msra.mxu0 0.0
    %119 = vmatprep.subr.mxu0 0.0
    %120 = vmatpush1.msra.mxu0 0.0
    %121 = vmatprep.subr.mxu0 0.0
    %122 = vmatpush1.msra.mxu0 0.0
    %123 = vmatprep.subr.mxu0 0.0
    %124 = vmatpush1.msra.mxu0 0.0
    %125 = vmatprep.subr.mxu0 0.0
    %126 = vmatpush1.msra.mxu0 0.0
    %127 = vmatprep.mubr.f32.mxu0 0.0
    %128 = vmatmul.mubr.f32.gmra.mrb[0].mxu0 %v58
    %v129 = vpop.f32.mrb[0].mxu0
    %v130 = vadd.f32 %v54, %v129
    %v131 = vpop.f32.mrb[0].mxu0
    %132 = vmatprep.mubr.f32.mxu0 0.0
    %133 = vmatmul.mubr.f32.gmra.mrb[0].mxu0 %v61
    %v134 = vpop.f32.mrb[0].mxu0
    %v135 = vadd.f32 %v54, %v134
    %v136 = vpop.f32.mrb[0].mxu0
    %137 = vdwg.mxu0
    %vm138 = vcmask 785408
    %139 = vst.msk [vmem:[#allocation7] sm:$0xff] %vm138, %v130
    %140 = vst.msk [vmem:[#allocation7 + $0x8] sm:$0xff] %vm138, %v135
    // Predicated region
    $region22: #{tpu_custom_call.1} parent=1 // pred_check
      _
    $region23: #{tpu_custom_call.1} parent=1 // pred_check_branch
      %142 = sbr.rel (0) target = $region25
    $region24: #{tpu_custom_call.1} parent=1 // pred_region
      %s144 = ssub.s32 256, 256
      %145 = vsyncadd [#allocation4], %s144
      %s146 = sshll.u32 [#allocation7], 4
      %s147 = int_to_ptr.vmem [resolvable:$true] %s146
      %152 = dma.vmem_to_hbm [thread:$0]  %s147, 256, %s3, [#allocation4], 128, 128, 8
    $region25: #{tpu_custom_call.1} parent=1 // pred_fallthru
      _
    // Predicated region
    $region26: #{tpu_custom_call.1} parent=1 // pred_check
      _
    $region27: #{tpu_custom_call.1} parent=1 // pred_check_branch
      %154 = sbr.rel (0) target = $region29
    $region28: #{tpu_custom_call.1} parent=1 // pred_region
      %155 = dma.done [#allocation4], 256
    $region29: #{tpu_custom_call.1} parent=1 // pred_fallthru
      _
    %156 = vsyncpa [#allocation3], 1
    %157 = vsyncpa [#allocation6], 1
    %158 = vsyncpa [#allocation4], 1

</llo_original>
